<compile_context>
chip_gen: v7x
topology: tpu7x:2x2x1
jax: 0.10.0
libtpu: 0.0.40
codegen_flags: <defaults>
</compile_context>

<pallas_src>
import jax
import jax.numpy as jnp
from jax.experimental import pallas as pl
from jax.experimental.pallas import tpu as pltpu


def _round_up(x, m):
    return ((x + m - 1) // m) * m


def decoder_kernel(x_ref, w0_ref, b0_ref, w1_ref, b1_ref, o_ref):
    # Cast the f32 activation tile to the MXU input dtype *inside* the kernel
    # (no extra HBM pass); both matmuls accumulate in f32 on the MXU.
    x = x_ref[...].astype(w0_ref.dtype)
    h = jnp.dot(x, w0_ref[...], preferred_element_type=jnp.float32)
    h = jnp.maximum(h + b0_ref[...], 0.0)              # bias + ReLU (f32, VPU)
    h = h.astype(w1_ref.dtype)                         # back to MXU input dtype
    y = jnp.dot(h, w1_ref[...], preferred_element_type=jnp.float32) + b1_ref[...]
    o_ref[...] = jax.nn.sigmoid(y).astype(o_ref.dtype)  # sigmoid on the EUP


def prepare_params(w0, b0, w1, b1, *, use_bf16_mxu=True):
    """One-time parameter prep: pad hidden dim to a multiple of 128 and cast
    the weights to the MXU dtype. Biases stay f32. Zero padding is exact
    (padded hidden units contribute relu(0)=0 through zero rows of w1)."""
    emb, hidden = w0.shape
    out = w1.shape[1]
    hid_p = _round_up(hidden, 128)
    mxu_dtype = jnp.bfloat16 if use_bf16_mxu else w0.dtype
    w0_p = jnp.pad(w0, ((0, 0), (0, hid_p - hidden))).astype(mxu_dtype)
    b0_p = jnp.pad(b0, ((0, 0), (0, hid_p - hidden)))          # f32
    w1_p = jnp.pad(w1, ((0, hid_p - hidden), (0, 0))).astype(mxu_dtype)
    b1_p = b1                                                  # f32, unpadded
    return w0_p, b0_p, w1_p, b1_p


def decoder_forward(x, w0_p, b0_p, w1_p, b1_p, *, block_b=None):
    """x: (B, emb) f32; prepared params from `prepare_params`.
    Returns (B, out) float32."""
    B, emb = x.shape
    hid_p = w0_p.shape[1]
    out = w1_p.shape[1]

    sub = 16  # sublane multiple for the batch tile (safe for bf16 layouts)

    # Batch tiling: one step for small/medium batches; ~2048-row tiles (capped
    # at 4096) and >= 2 steps for larger batches so v7x megacore can shard.
    if block_b is None:
        if B <= 1024:
            block_b = _round_up(max(B, 1), sub)
        else:
            n_steps = max(2, pl.cdiv(B, 2048))
            block_b = min(4096, _round_up(pl.cdiv(B, n_steps), sub))
    block_b = _round_up(block_b, sub)
    B_p = _round_up(B, block_b)

    # Only batch-row padding of x (no lane padding, no dtype cast here).
    x_p = jnp.pad(x, ((0, B_p - B), (0, 0)))

    grid = (B_p // block_b,)

    operands = (x_p, w0_p, b0_p, w1_p, b1_p)
    bytes_accessed = int(
        sum(int(a.size) * jnp.dtype(a.dtype).itemsize for a in operands)
        + B_p * out * 4
    )
    flops = 2 * B_p * (emb * hid_p + hid_p * out)

    out_padded = pl.pallas_call(
        decoder_kernel,
        out_shape=jax.ShapeDtypeStruct((B_p, out), jnp.float32),
        grid_spec=pltpu.PrefetchScalarGridSpec(
            num_scalar_prefetch=0,
            grid=grid,
            in_specs=[
                # Activations: batch tile, true (unpadded) emb as the last dim.
                pl.BlockSpec((block_b, emb), lambda i: (i, 0)),
                # Weights / biases: full-array blocks, resident across the grid.
                pl.BlockSpec((emb, hid_p), lambda i: (0, 0)),
                pl.BlockSpec((1, hid_p), lambda i: (0, 0)),
                pl.BlockSpec((hid_p, out), lambda i: (0, 0)),
                pl.BlockSpec((1, out), lambda i: (0, 0)),
            ],
            # Unpadded output: last dim is the true out size (full-array dim).
            out_specs=pl.BlockSpec((block_b, out), lambda i: (i, 0)),
        ),
        compiler_params=pltpu.CompilerParams(
            dimension_semantics=("parallel",)),
        cost_estimate=pl.CostEstimate(
            flops=flops,
            transcendentals=B_p * out,          # sigmoid -> exp on the EUP
            bytes_accessed=bytes_accessed),
    )(*operands)

    # Strip batch-row padding only (no lane slice needed).
    return out_padded[:B]


def reference_forward_bf16(x, w0, b0, w1, b1):
    dt = jnp.bfloat16
    h = jnp.dot(x.astype(dt), w0.astype(dt),
                preferred_element_type=jnp.float32) + b0
    h = jnp.maximum(h, 0.0)
    y = jnp.dot(h.astype(dt), w1.astype(dt),
                preferred_element_type=jnp.float32) + b1
    return jax.nn.sigmoid(y)


def reference_forward_f32(x, w0, b0, w1, b1):
    h = jnp.maximum(x @ w0 + b0, 0.0)
    return jax.nn.sigmoid(h @ w1 + b1)


if __name__ == "__main__":
    # Small shapes consistent with the module:
    # Decoder(emb_size=32, out_size=16, hidden_size=128), batch=16.
    batch, emb_size, hidden_size, out_size = 16, 32, 128, 16

    key = jax.random.PRNGKey(0)
    kx, kw0, kb0, kw1, kb1 = jax.random.split(key, 5)

    x = jax.random.normal(kx, (batch, emb_size), dtype=jnp.float32)

    # Deterministic parameter init (PyTorch-style uniform(-1/sqrt(fan_in), +)).
    lim0 = 1.0 / jnp.sqrt(emb_size)
    lim1 = 1.0 / jnp.sqrt(hidden_size)
    w0 = jax.random.uniform(kw0, (emb_size, hidden_size), jnp.float32, -lim0, lim0)
    b0 = jax.random.uniform(kb0, (1, hidden_size), jnp.float32, -lim0, lim0)
    w1 = jax.random.uniform(kw1, (hidden_size, out_size), jnp.float32, -lim1, lim1)
    b1 = jax.random.uniform(kb1, (1, out_size), jnp.float32, -lim1, lim1)

    # One-time parameter prep (pad hidden + cast to bf16), then run the kernel.
    params = prepare_params(w0, b0, w1, b1)
    out = decoder_forward(x, *params)
    out = jax.block_until_ready(out)
    assert out.shape == (batch, out_size)

    # Tight check vs. a reference using the same bf16 MXU inputs.
    ref_bf16 = reference_forward_bf16(x, w0, b0, w1, b1)
    assert jnp.allclose(out, ref_bf16, atol=1e-4, rtol=1e-4), "mismatch vs bf16 reference"

    # Loose sanity check vs. the full-f32 PyTorch-equivalent math.
    ref_f32 = reference_forward_f32(x, w0, b0, w1, b1)
    assert jnp.allclose(out, ref_f32, atol=2e-2, rtol=2e-2), "mismatch vs f32 reference"

    print("KERNEL_OK")
</pallas_src>

<mosaic_0001>
module attributes {stable_mosaic.version = 11 : i64} {
  func.func @decoder_kernel(%arg0: i32, %arg1: memref<16x32xf32, #tpu.memory_space<vmem>>, %arg2: memref<32x128xbf16, #tpu.memory_space<vmem>>, %arg3: memref<1x128xf32, #tpu.memory_space<vmem>>, %arg4: memref<128x16xbf16, #tpu.memory_space<vmem>>, %arg5: memref<1x16xf32, #tpu.memory_space<vmem>>, %arg6: memref<16x16xf32, #tpu.memory_space<vmem>>) attributes {dimension_semantics = [#tpu.dimension_semantics<parallel>], iteration_bounds = array<i64: 1>, scalar_prefetch = 0 : i64, scratch_operands = 0 : i64, tpu.core_type = #tpu.core_type<tc>, window_params = [{transform_indices = @transform_0, window_bounds = array<i64: 16, 32>}, {pipeline_mode = #tpu.pipeline_mode<synchronous>, transform_indices = @transform_1, window_bounds = array<i64: 32, 128>}, {pipeline_mode = #tpu.pipeline_mode<synchronous>, transform_indices = @transform_2, window_bounds = array<i64: 1, 128>}, {pipeline_mode = #tpu.pipeline_mode<synchronous>, transform_indices = @transform_3, window_bounds = array<i64: 128, 16>}, {pipeline_mode = #tpu.pipeline_mode<synchronous>, transform_indices = @transform_4, window_bounds = array<i64: 1, 16>}, {transform_indices = @transform_5, window_bounds = array<i64: 16, 16>}]} {
    %c0 = arith.constant 0 : index
    %c0_0 = arith.constant 0 : index
    %0 = vector.load %arg1[%c0, %c0_0] : memref<16x32xf32, #tpu.memory_space<vmem>>, vector<16x32xf32>
    %1 = arith.truncf %0 : vector<16x32xf32> to vector<16x32xbf16>
    %c0_1 = arith.constant 0 : index
    %c0_2 = arith.constant 0 : index
    %2 = vector.load %arg2[%c0_1, %c0_2] : memref<32x128xbf16, #tpu.memory_space<vmem>>, vector<32x128xbf16>
    %cst = arith.constant dense<0.000000e+00> : vector<16x128xf32>
    %3 = tpu.matmul %1, %2, %cst {dimension_numbers = #tpu.dot_dimension_numbers<[1], [0], [0], [1], [0, 0, 1, 1], [], []>} : vector<16x32xbf16>, vector<32x128xbf16>, vector<16x128xf32> -> vector<16x128xf32>
    %c0_3 = arith.constant 0 : index
    %c0_4 = arith.constant 0 : index
    %4 = vector.load %arg3[%c0_3, %c0_4] : memref<1x128xf32, #tpu.memory_space<vmem>>, vector<1x128xf32>
    %5 = vector.broadcast %4 : vector<1x128xf32> to vector<16x128xf32>
    %6 = arith.addf %3, %5 : vector<16x128xf32>
    %cst_5 = arith.constant 0.000000e+00 : f32
    %7 = vector.broadcast %cst_5 : f32 to vector<16x128xf32>
    %8 = arith.maximumf %6, %7 : vector<16x128xf32>
    %9 = arith.truncf %8 : vector<16x128xf32> to vector<16x128xbf16>
    %c0_6 = arith.constant 0 : index
    %c0_7 = arith.constant 0 : index
    %10 = vector.load %arg4[%c0_6, %c0_7] : memref<128x16xbf16, #tpu.memory_space<vmem>>, vector<128x16xbf16>
    %cst_8 = arith.constant dense<0.000000e+00> : vector<16x16xf32>
    %11 = tpu.matmul %9, %10, %cst_8 {dimension_numbers = #tpu.dot_dimension_numbers<[1], [0], [0], [1], [0, 0, 1, 1], [], []>} : vector<16x128xbf16>, vector<128x16xbf16>, vector<16x16xf32> -> vector<16x16xf32>
    %c0_9 = arith.constant 0 : index
    %c0_10 = arith.constant 0 : index
    %12 = vector.load %arg5[%c0_9, %c0_10] : memref<1x16xf32, #tpu.memory_space<vmem>>, vector<1x16xf32>
    %13 = vector.broadcast %12 : vector<1x16xf32> to vector<16x16xf32>
    %14 = arith.addf %11, %13 : vector<16x16xf32>
    %15 = arith.negf %14 : vector<16x16xf32>
    %16 = math.exp %15 : vector<16x16xf32>
    %cst_11 = arith.constant 1.000000e+00 : f32
    %17 = vector.broadcast %cst_11 : f32 to vector<16x16xf32>
    %18 = arith.addf %17, %16 : vector<16x16xf32>
    %19 = arith.divf %17, %18 : vector<16x16xf32>
    %c0_12 = arith.constant 0 : index
    %c0_13 = arith.constant 0 : index
    %20 = vector.load %arg6[%c0_12, %c0_13] : memref<16x16xf32, #tpu.memory_space<vmem>>, vector<16x16xf32>
    tpu.vector_store %arg6[%c0_12, %c0_13], %19 {strides = array<i32>} : memref<16x16xf32, #tpu.memory_space<vmem>>, vector<16x16xf32>,
    return
  }
  func.func @transform_0(%arg0: i32) -> (i32, i32) {
    %c0_i32 = arith.constant 0 : i32
    %c0_i32_0 = arith.constant 0 : i32
    return %arg0, %c0_i32 : i32, i32
  }
  func.func @transform_1(%arg0: i32) -> (i32, i32) {
    %c0_i32 = arith.constant 0 : i32
    %c0_i32_0 = arith.constant 0 : i32
    %c0_i32_1 = arith.constant 0 : i32
    return %c0_i32, %c0_i32_0 : i32, i32
  }
  func.func @transform_2(%arg0: i32) -> (i32, i32) {
    %c0_i32 = arith.constant 0 : i32
    %c0_i32_0 = arith.constant 0 : i32
    %c0_i32_1 = arith.constant 0 : i32
    return %c0_i32, %c0_i32_0 : i32, i32
  }
  func.func @transform_3(%arg0: i32) -> (i32, i32) {
    %c0_i32 = arith.constant 0 : i32
    %c0_i32_0 = arith.constant 0 : i32
    %c0_i32_1 = arith.constant 0 : i32
    return %c0_i32, %c0_i32_0 : i32, i32
  }
  func.func @transform_4(%arg0: i32) -> (i32, i32) {
    %c0_i32 = arith.constant 0 : i32
    %c0_i32_0 = arith.constant 0 : i32
    %c0_i32_1 = arith.constant 0 : i32
    return %c0_i32, %c0_i32_0 : i32, i32
  }
  func.func @transform_5(%arg0: i32) -> (i32, i32) {
    %c0_i32 = arith.constant 0 : i32
    %c0_i32_0 = arith.constant 0 : i32
    return %arg0, %c0_i32 : i32, i32
  }
}

</mosaic_0001>

<llo_original>
// kernel: tpu_custom_call.1
$region0: #{tpu_custom_call.1}
  #allocation0 [shape = 'u32[]', space=smem, size = 0x4, offset = 0x4, fixed_abs, tag = 'smem constant byte address 0x4 - core index']
  #allocation1 [shape = 'u32[144,128]{1,0:T(1,128)}', space=vmem, size = 0x12000, scoped, tag = 'internal scratch']
  %s0 = inlined_call_operand.vmem [shape: f32[16,32], index: 0, kind: input, shape index: {}]
  %s1 = inlined_call_operand.vmem [shape: bf16[32,128], index: 1, kind: input, shape index: {}]
  %s2 = inlined_call_operand.vmem [shape: f32[1,128], index: 2, kind: input, shape index: {}]
  %s3 = inlined_call_operand.vmem [shape: bf16[128,16], index: 3, kind: input, shape index: {}]
  %s4 = inlined_call_operand.vmem [shape: f32[1,16], index: 4, kind: input, shape index: {}]
  %s5 = inlined_call_operand.hbm [shape: f32[16,16], index: 5, kind: output, shape index: {}]
  %s6 = sld [smem:[#allocation0]]
  $region30: #{tpu_custom_call.1} parent=0
    _
  %s8 = ssub.s32 1, %s6
  %s9 = scalar_select 0, %s8, %s6
  $region1: #{tpu_custom_call.1} parent=0
    #allocation2 [shape = 'u8[8192]{0}', space=vmem, size = 0x2000, scoped, tag = 'output window, operand 0, single buffered']
    #allocation3 [shape = 's32[1]{0}', space=sflag, size = 0x4, scoped, tag = 'scoped memory for tpu_custom_call.1']
    %10 = vsyncpa [#allocation3], 0
    // Predicated region
    $region2: #{tpu_custom_call.1} parent=1 // pred_check
      _
    $region3: #{tpu_custom_call.1} parent=1 // pred_check_branch
      %12 = sbr.rel (0) target = $region5
    $region4: #{tpu_custom_call.1} parent=1 // pred_region
      _
    $region5: #{tpu_custom_call.1} parent=1 // pred_fallthru
      _
    // Predicated region
    $region6: #{tpu_custom_call.1} parent=1 // pred_check
      _
    $region7: #{tpu_custom_call.1} parent=1 // pred_check_branch
      %14 = sbr.rel (0) target = $region9
    $region8: #{tpu_custom_call.1} parent=1 // pred_region
      _
    $region9: #{tpu_custom_call.1} parent=1 // pred_fallthru
      _
    // Predicated region
    $region10: #{tpu_custom_call.1} parent=1 // pred_check
      _
    $region11: #{tpu_custom_call.1} parent=1 // pred_check_branch
      %16 = sbr.rel (0) target = $region13
    $region12: #{tpu_custom_call.1} parent=1 // pred_region
      _
    $region13: #{tpu_custom_call.1} parent=1 // pred_fallthru
      _
    // Predicated region
    $region14: #{tpu_custom_call.1} parent=1 // pred_check
      _
    $region15: #{tpu_custom_call.1} parent=1 // pred_check_branch
      %18 = sbr.rel (0) target = $region17
    $region16: #{tpu_custom_call.1} parent=1 // pred_region
      _
    $region17: #{tpu_custom_call.1} parent=1 // pred_fallthru
      _
    // Predicated region
    $region18: #{tpu_custom_call.1} parent=1 // pred_check
      _
    $region19: #{tpu_custom_call.1} parent=1 // pred_check_branch
      %20 = sbr.rel (0) target = $region21
    $region20: #{tpu_custom_call.1} parent=1 // pred_region
      _
    $region21: #{tpu_custom_call.1} parent=1 // pred_fallthru
      _
    %v22 = vld [vmem:[%s0] sm:$0xff]
    %v23 = vld [vmem:[%s0 + $0x8] sm:$0xff]
    %v24 = vpack.c.bf16 %v23, %v22
    %v25 = vld [vmem:[%s1] sm:$0xf]
    %v26 = vld [vmem:[%s1 + $0x4] sm:$0xf]
    %v27 = vld [vmem:[%s1 + $0x8] sm:$0xf]
    %v28 = vld [vmem:[%s1 + $0xc] sm:$0xf]
    %v29 = vld [vmem:[%s2] sm:$0x1]
    %v31 = vlaneseq
    %v32 = vshrl.u32 %v31, 7
    %v33 = vsub.s32 0, %v32
    %v34 = vrot.slane %v29, %v33
    %v40 = vunpack.c.l.b16 %v25
    %v41 = vunpack.c.l.b16 %v26
    %v42 = vunpack.c.l.b16 %v27
    %v43 = vunpack.c.l.b16 %v28
    %v44 = vpack.c.b16 %v41, %v40
    %v45 = vpack.c.b16 %v43, %v42
    %vm48 = vcmask 261120
    %v50 = vsel %vm48, %v24, 0
    %52 = vmatprep.subr.bf16.mxu0 0
    %53 = vmatpush1.bf16.msra.mxu0 %v44
    %54 = vmatprep.subr.bf16.mxu0 0
    %55 = vmatpush1.bf16.msra.mxu0 %v45
    %56 = vmatprep.subr.bf16.mxu0 0
    %57 = vmatpush1.bf16.msra.mxu0 0
    %58 = vmatprep.subr.bf16.mxu0 0
    %59 = vmatpush1.bf16.msra.mxu0 0
    %60 = vmatprep.subr.bf16.mxu0 0
    %61 = vmatpush1.bf16.msra.mxu0 0
    %62 = vmatprep.subr.bf16.mxu0 0
    %63 = vmatpush1.bf16.msra.mxu0 0
    %64 = vmatprep.subr.bf16.mxu0 0
    %65 = vmatpush1.bf16.msra.mxu0 0
    %66 = vmatprep.subr.bf16.mxu0 0
    %67 = vmatpush1.bf16.msra.mxu0 0
    %68 = vmatprep.subr.bf16.mxu0 0
    %69 = vmatpush1.bf16.msra.mxu0 0
    %70 = vmatprep.subr.bf16.mxu0 0
    %71 = vmatpush1.bf16.msra.mxu0 0
    %72 = vmatprep.subr.bf16.mxu0 0
    %73 = vmatpush1.bf16.msra.mxu0 0
    %74 = vmatprep.subr.bf16.mxu0 0
    %75 = vmatpush1.bf16.msra.mxu0 0
    %76 = vmatprep.subr.bf16.mxu0 0
    %77 = vmatpush1.bf16.msra.mxu0 0
    %78 = vmatprep.subr.bf16.mxu0 0
    %79 = vmatpush1.bf16.msra.mxu0 0
    %80 = vmatprep.subr.bf16.mxu0 0
    %81 = vmatpush1.bf16.msra.mxu0 0
    %82 = vmatprep.subr.bf16.mxu0 0
    %83 = vmatpush1.bf16.msra.mxu0 0
    %84 = vmatprep.mubr.bf16.mxu0 0
    %85 = vmatmul.mubr.bf16.gmra.mrb[0].mxu0 %v50
    %v86 = vpop.f32.mrb[0].mxu0
    %v87 = vadd.f32 %v34, %v86
    %v88 = vpop.f32.mrb[0].mxu0
    %v89 = vpop.f32.mrb[0].mxu0
    %v90 = vadd.f32 %v34, %v89
    %v91 = vpop.f32.mrb[0].mxu0
    %92 = vdwg.mxu0
    %v93 = vmax.f32 %v87, 0.0
    %v94 = vmax.f32 %v90, 0.0
    %v95 = vpack.c.bf16 %v94, %v93
    %v96 = vld [vmem:[%s3] sm:$0xf]
    %v97 = vld [vmem:[%s3 + $0x4] sm:$0xf]
    %v98 = vld [vmem:[%s3 + $0x8] sm:$0xf]
    %v99 = vld [vmem:[%s3 + $0xc] sm:$0xf]
    %v100 = vld [vmem:[%s3 + $0x10] sm:$0xf]
    %v101 = vld [vmem:[%s3 + $0x14] sm:$0xf]
    %v102 = vld [vmem:[%s3 + $0x18] sm:$0xf]
    %v103 = vld [vmem:[%s3 + $0x1c] sm:$0xf]
    %v104 = vld [vmem:[%s3 + $0x20] sm:$0xf]
    %v105 = vld [vmem:[%s3 + $0x24] sm:$0xf]
    %v106 = vld [vmem:[%s3 + $0x28] sm:$0xf]
    %v107 = vld [vmem:[%s3 + $0x2c] sm:$0xf]
    %v108 = vld [vmem:[%s3 + $0x30] sm:$0xf]
    %v109 = vld [vmem:[%s3 + $0x34] sm:$0xf]
    %v110 = vld [vmem:[%s3 + $0x38] sm:$0xf]
    %v111 = vld [vmem:[%s3 + $0x3c] sm:$0xf]
    %v112 = vld [vmem:[%s4] sm:$0x1]
    %v114 = vlaneseq
    %v115 = vshrl.u32 %v114, 7
    %v116 = vsub.s32 0, %v115
    %v117 = vrot.slane %v112, %v116
    %v135 = vunpack.c.l.b16 %v96
    %v136 = vunpack.c.l.b16 %v97
    %v137 = vunpack.c.l.b16 %v98
    %v138 = vunpack.c.l.b16 %v99
    %v139 = vunpack.c.l.b16 %v100
    %v140 = vunpack.c.l.b16 %v101
    %v141 = vunpack.c.l.b16 %v102
    %v142 = vunpack.c.l.b16 %v103
    %v143 = vunpack.c.l.b16 %v104
    %v144 = vunpack.c.l.b16 %v105
    %v145 = vunpack.c.l.b16 %v106
    %v146 = vunpack.c.l.b16 %v107
    %v147 = vunpack.c.l.b16 %v108
    %v148 = vunpack.c.l.b16 %v109
    %v149 = vunpack.c.l.b16 %v110
    %v150 = vunpack.c.l.b16 %v111
    %v151 = vpack.c.b16 %v136, %v135
    %v152 = vpack.c.b16 %v138, %v137
    %v153 = vpack.c.b16 %v140, %v139
    %v154 = vpack.c.b16 %v142, %v141
    %v155 = vpack.c.b16 %v144, %v143
    %v156 = vpack.c.b16 %v146, %v145
    %v157 = vpack.c.b16 %v148, %v147
    %v158 = vpack.c.b16 %v150, %v149
    %167 = vmatprep.subr.bf16.mxu0 0
    %168 = vmatpush1.bf16.msra.mxu0 %v151
    %169 = vmatprep.subr.bf16.mxu0 0
    %170 = vmatpush1.bf16.msra.mxu0 %v152
    %171 = vmatprep.subr.bf16.mxu0 0
    %172 = vmatpush1.bf16.msra.mxu0 %v153
    %173 = vmatprep.subr.bf16.mxu0 0
    %174 = vmatpush1.bf16.msra.mxu0 %v154
    %175 = vmatprep.subr.bf16.mxu0 0
    %176 = vmatpush1.bf16.msra.mxu0 %v155
    %177 = vmatprep.subr.bf16.mxu0 0
    %178 = vmatpush1.bf16.msra.mxu0 %v156
    %179 = vmatprep.subr.bf16.mxu0 0
    %180 = vmatpush1.bf16.msra.mxu0 %v157
    %181 = vmatprep.subr.bf16.mxu0 0
    %182 = vmatpush1.bf16.msra.mxu0 %v158
    %183 = vmatprep.subr.bf16.mxu0 0
    %184 = vmatpush1.bf16.msra.mxu0 0
    %185 = vmatprep.subr.bf16.mxu0 0
    %186 = vmatpush1.bf16.msra.mxu0 0
    %187 = vmatprep.subr.bf16.mxu0 0
    %188 = vmatpush1.bf16.msra.mxu0 0
    %189 = vmatprep.subr.bf16.mxu0 0
    %190 = vmatpush1.bf16.msra.mxu0 0
    %191 = vmatprep.subr.bf16.mxu0 0
    %192 = vmatpush1.bf16.msra.mxu0 0
    %193 = vmatprep.subr.bf16.mxu0 0
    %194 = vmatpush1.bf16.msra.mxu0 0
    %195 = vmatprep.subr.bf16.mxu0 0
    %196 = vmatpush1.bf16.msra.mxu0 0
    %197 = vmatprep.subr.bf16.mxu0 0
    %198 = vmatpush1.bf16.msra.mxu0 0
    %199 = vmatprep.mubr.bf16.mxu0 0
    %200 = vmatmul.mubr.bf16.gmra.mrb[0].mxu0 %v95
    %v201 = vpop.f32.mrb[0].mxu0
    %v202 = vadd.f32 %v117, %v201
    %v203 = vpop.f32.mrb[0].mxu0
    %v204 = vpop.f32.mrb[0].mxu0
    %v205 = vadd.f32 %v117, %v204
    %v206 = vpop.f32.mrb[0].mxu0
    %207 = vdwg.mxu0
    %v208 = vxor.u32 %v202, 2147483648
    %v209 = vxor.u32 %v205, 2147483648
    %v210 = vmul.f32 %v208, 1.442695
    %v211 = vpow.pop %v210
    %v212 = vmul.f32 %v209, 1.442695
    %v213 = vpow.pop %v212
    %v214 = vadd.f32 %v211, 1.0
    %v215 = vadd.f32 %v213, 1.0
    %v216 = vrcp.pop %v214
    %v217 = vmul.f32 1.0, %v216
    %v218 = vrcp.pop %v215
    %v219 = vmul.f32 1.0, %v218
    %vm220 = vcmask 130048
    %221 = vst.msk [vmem:[#allocation2] sm:$0xff] %vm220, %v217
    %222 = vst.msk [vmem:[#allocation2 + $0x8] sm:$0xff] %vm220, %v219
    // Predicated region
    $region22: #{tpu_custom_call.1} parent=1 // pred_check
      _
    $region23: #{tpu_custom_call.1} parent=1 // pred_check_branch
      %224 = sbr.rel (0) target = $region25
    $region24: #{tpu_custom_call.1} parent=1 // pred_region
      %s226 = ssub.s32 256, 256
      %227 = vsyncadd [#allocation3], %s226
      %s228 = sshll.u32 [#allocation2], 4
      %s229 = int_to_ptr.vmem [resolvable:$true] %s228
      %234 = dma.vmem_to_hbm [thread:$0]  %s229, 256, %s5, [#allocation3], 128, 128, 8
    $region25: #{tpu_custom_call.1} parent=1 // pred_fallthru
      _
    // Predicated region
    $region26: #{tpu_custom_call.1} parent=1 // pred_check
      _
    $region27: #{tpu_custom_call.1} parent=1 // pred_check_branch
      %236 = sbr.rel (0) target = $region29
    $region28: #{tpu_custom_call.1} parent=1 // pred_region
      %237 = dma.done [#allocation3], 256
    $region29: #{tpu_custom_call.1} parent=1 // pred_fallthru
      _
    %238 = vsyncpa [#allocation3], 1

</llo_original>
